<compile_context>
chip_gen: v7x
topology: tpu7x:2x2x1
jax: 0.10.0
libtpu: 0.0.40
codegen_flags: <defaults>
</compile_context>

<pallas_src>
import functools

import jax
import jax.numpy as jnp
from jax.experimental import pallas as pl
from jax.experimental.pallas import tpu as pltpu


def one_layer_net_kernel(x_ref, wt_ref, b_ref, o_ref):
    """Fused y = relu(x @ Wt + b) @ Wt + b for one batch tile, all on-chip."""
    wt = wt_ref[...]          # (D_in, D_out) pre-transposed weight, VMEM-resident
    b = b_ref[...]            # (1, D_out) f32 bias, broadcasts over the batch tile

    def chain(rows):
        x = x_ref[rows, :]
        # linear1 + clamp(min=0): MXU matmul with f32 accumulation, f32 epilogue.
        h = jnp.dot(x, wt, preferred_element_type=jnp.float32) + b
        h = jnp.maximum(h, 0.0)
        # Second application of the SAME linear layer (requires D_in == D_out).
        y = jnp.dot(h.astype(wt.dtype), wt, preferred_element_type=jnp.float32) + b
        o_ref[rows, :] = y.astype(o_ref.dtype)

    tm = x_ref.shape[0]
    if tm >= 16 and tm % 16 == 0:
        # Two independent dependency chains -> the scheduler overlaps one half's
        # second matmul with the other half's bias+ReLU epilogue (MXU stays busy).
        chain(slice(0, tm // 2))
        chain(slice(tm // 2, tm))
    else:
        chain(slice(0, tm))


@functools.partial(jax.jit, static_argnames=("tm",))
def one_layer_net(x, wt, b2d, *, tm):
    """x: (B, D_in), wt: (D_in, D_out) PRE-transposed weight, b2d: (1, D_out) f32."""
    B, D_in = x.shape
    D_in_w, D_out = wt.shape
    assert D_in == D_in_w, "weight shape mismatch"
    assert D_in == D_out, "OneLayerNet applies linear1 twice, so D_in must equal D_out"
    assert B % tm == 0 and tm % 8 == 0, "batch tile must divide B and be (8,128)-aligned"

    itemsize = jnp.dtype(x.dtype).itemsize
    w_bytes = wt.size * jnp.dtype(wt.dtype).itemsize
    # 2x-buffered x / out tiles + resident weight & bias (double-buffered by default).
    vmem_needed = (2 * tm * D_in * itemsize
                   + 2 * tm * D_out * itemsize
                   + 2 * w_bytes
                   + 2 * D_out * 4)
    # Explicit scoped-VMEM budget: v5e's default is only 16 MiB; cap at v7x's
    # 64 MiB physical so the same code holds across generations.
    vmem_limit = int(min(max(2 * vmem_needed, 32 * 2 ** 20), 64 * 2 ** 20))

    cost = pl.CostEstimate(
        flops=2 * 2 * B * D_in * D_out,          # two back-to-back matmuls
        transcendentals=0,
        bytes_accessed=(x.size * itemsize + w_bytes + D_out * 4
                        + B * D_out * itemsize),
    )

    return pl.pallas_call(
        one_layer_net_kernel,
        out_shape=jax.ShapeDtypeStruct((B, D_out), x.dtype),
        grid_spec=pltpu.PrefetchScalarGridSpec(
            num_scalar_prefetch=0,
            grid=(pl.cdiv(B, tm),),
            in_specs=[
                # x: pipelined (double-buffered) batch tile.
                pl.BlockSpec((tm, D_in), lambda i: (i, 0)),
                # Weight / bias: constant index_map -> fetched once, stay resident.
                # TODO(synk): at large D (f32 D >= ~2-4k) single-buffer these
                # (pipeline_mode=pl.Buffered(1)) and switch to a K/N-tiled
                # two-phase scheme so the v7x 64 MiB VMEM budget still holds.
                pl.BlockSpec((D_in, D_out), lambda i: (0, 0)),
                pl.BlockSpec((1, D_out), lambda i: (0, 0)),
            ],
            out_specs=pl.BlockSpec((tm, D_out), lambda i: (i, 0)),
        ),
        compiler_params=pltpu.CompilerParams(
            # Independent batch tiles -> shard across the 2 TensorCores on v7x.
            dimension_semantics=("parallel",),
            vmem_limit_bytes=vmem_limit,
        ),
        cost_estimate=cost,
    )(x, wt, b2d)


def prepare_params(w, b):
    """One-time parameter prep (do this at init, not per forward call):
    torch-layout W (D_out, D_in) -> Wt (D_in, D_out); bias -> (1, D_out) f32."""
    return jnp.asarray(w).T, jnp.asarray(b, dtype=jnp.float32).reshape(1, -1)


def pick_batch_tile(B):
    """Per-generation batch tile: a single grid step on v5e/v6e (amortize the
    ~0.35us per-step overhead), >=2 steps on v7x so both TensorCores get work."""
    kind = ""
    try:
        kind = jax.devices()[0].device_kind.lower()
    except Exception:
        pass
    two_tensorcores = ("v7" in kind) or ("7x" in kind)
    tm = B // 2 if (two_tensorcores and B % 16 == 0) else B
    tm = min(tm, 512)  # >=512-row tiles already reach ~85% of HBM roofline
    while tm > 8 and (B % tm or tm % 8):
        tm //= 2
    assert tm >= 8 and B % tm == 0 and tm % 8 == 0
    return tm


def one_layer_net_ref(x, w, b):
    """Pure-JAX reference of the PyTorch forward (torch-layout weight)."""
    h = jnp.maximum(x @ w.T + b, 0.0)
    return h @ w.T + b


if __name__ == "__main__":
    # Small but lane-dense shapes: D a multiple of 128, D_in == D_out as the module requires.
    B, D = 256, 128

    key = jax.random.PRNGKey(0)
    kx, kw, kb = jax.random.split(key, 3)

    # Deterministic init mimicking torch.nn.Linear: U(-1/sqrt(D_in), 1/sqrt(D_in)).
    bound = 1.0 / (D ** 0.5)
    x = jax.random.normal(kx, (B, D), dtype=jnp.float32)
    w = jax.random.uniform(kw, (D, D), dtype=jnp.float32, minval=-bound, maxval=bound)  # (D_out, D_in)
    b = jax.random.uniform(kb, (D,), dtype=jnp.float32, minval=-bound, maxval=bound)

    wt, b2d = prepare_params(w, b)          # once, outside the jitted forward
    tm = pick_batch_tile(B)

    # f32 operand path (tight numerical check).
    y = jax.block_until_ready(one_layer_net(x, wt, b2d, tm=tm))
    y_ref = one_layer_net_ref(x, w, b)
    assert y.shape == (B, D)
    assert jnp.allclose(y, y_ref, atol=1e-4, rtol=1e-4), "f32 Pallas output mismatch vs reference"

    # bf16 operand path (recommended on v6e/v7x: native bf16 MXU, half the HBM
    # traffic; accumulation stays f32 inside the kernel). Looser tolerance.
    x16, wt16 = x.astype(jnp.bfloat16), wt.astype(jnp.bfloat16)
    y16 = jax.block_until_ready(one_layer_net(x16, wt16, b2d, tm=tm))
    assert jnp.allclose(y16.astype(jnp.float32), y_ref, atol=5e-2, rtol=5e-2), \
        "bf16 Pallas output mismatch vs reference"

    print("KERNEL_OK")
</pallas_src>

<mosaic_0001>
module attributes {stable_mosaic.version = 11 : i64} {
  func.func @one_layer_net_kernel(%arg0: i32, %arg1: memref<256x128xf32, #tpu.memory_space<vmem>>, %arg2: memref<128x128xf32, #tpu.memory_space<vmem>>, %arg3: memref<1x128xf32, #tpu.memory_space<vmem>>, %arg4: memref<256x128xf32, #tpu.memory_space<vmem>>) attributes {dimension_semantics = [#tpu.dimension_semantics<parallel>], iteration_bounds = array<i64: 1>, scalar_prefetch = 0 : i64, scratch_operands = 0 : i64, tpu.core_type = #tpu.core_type<tc>, window_params = [{transform_indices = @transform_0, window_bounds = array<i64: 256, 128>}, {pipeline_mode = #tpu.pipeline_mode<synchronous>, transform_indices = @transform_1, window_bounds = array<i64: 128, 128>}, {pipeline_mode = #tpu.pipeline_mode<synchronous>, transform_indices = @transform_2, window_bounds = array<i64: 1, 128>}, {transform_indices = @transform_3, window_bounds = array<i64: 256, 128>}]} {
    %c0 = arith.constant 0 : index
    %c0_0 = arith.constant 0 : index
    %0 = vector.load %arg2[%c0, %c0_0] : memref<128x128xf32, #tpu.memory_space<vmem>>, vector<128x128xf32>
    %c0_1 = arith.constant 0 : index
    %c0_2 = arith.constant 0 : index
    %1 = vector.load %arg3[%c0_1, %c0_2] : memref<1x128xf32, #tpu.memory_space<vmem>>, vector<1x128xf32>
    %c0_3 = arith.constant 0 : index
    %c0_4 = arith.constant 0 : index
    %2 = vector.load %arg1[%c0_3, %c0_4] : memref<256x128xf32, #tpu.memory_space<vmem>>, vector<128x128xf32>
    %cst = arith.constant dense<0.000000e+00> : vector<128x128xf32>
    %3 = tpu.matmul %2, %0, %cst {dimension_numbers = #tpu.dot_dimension_numbers<[1], [0], [0], [1], [0, 0, 1, 1], [], []>} : vector<128x128xf32>, vector<128x128xf32>, vector<128x128xf32> -> vector<128x128xf32>
    %4 = vector.broadcast %1 : vector<1x128xf32> to vector<128x128xf32>
    %5 = arith.addf %3, %4 : vector<128x128xf32>
    %cst_5 = arith.constant 0.000000e+00 : f32
    %6 = vector.broadcast %cst_5 : f32 to vector<128x128xf32>
    %7 = arith.maximumf %5, %6 : vector<128x128xf32>
    %cst_6 = arith.constant dense<0.000000e+00> : vector<128x128xf32>
    %8 = tpu.matmul %7, %0, %cst_6 {dimension_numbers = #tpu.dot_dimension_numbers<[1], [0], [0], [1], [0, 0, 1, 1], [], []>} : vector<128x128xf32>, vector<128x128xf32>, vector<128x128xf32> -> vector<128x128xf32>
    %9 = vector.broadcast %1 : vector<1x128xf32> to vector<128x128xf32>
    %10 = arith.addf %8, %9 : vector<128x128xf32>
    %c0_7 = arith.constant 0 : index
    %c0_8 = arith.constant 0 : index
    %11 = vector.load %arg4[%c0_7, %c0_8] : memref<256x128xf32, #tpu.memory_space<vmem>>, vector<128x128xf32>
    tpu.vector_store %arg4[%c0_7, %c0_8], %10 {strides = array<i32>} : memref<256x128xf32, #tpu.memory_space<vmem>>, vector<128x128xf32>,
    %c128 = arith.constant 128 : index
    %c0_9 = arith.constant 0 : index
    %12 = vector.load %arg1[%c128, %c0_9] : memref<256x128xf32, #tpu.memory_space<vmem>>, vector<128x128xf32>
    %cst_10 = arith.constant dense<0.000000e+00> : vector<128x128xf32>
    %13 = tpu.matmul %12, %0, %cst_10 {dimension_numbers = #tpu.dot_dimension_numbers<[1], [0], [0], [1], [0, 0, 1, 1], [], []>} : vector<128x128xf32>, vector<128x128xf32>, vector<128x128xf32> -> vector<128x128xf32>
    %14 = vector.broadcast %1 : vector<1x128xf32> to vector<128x128xf32>
    %15 = arith.addf %13, %14 : vector<128x128xf32>
    %cst_11 = arith.constant 0.000000e+00 : f32
    %16 = vector.broadcast %cst_11 : f32 to vector<128x128xf32>
    %17 = arith.maximumf %15, %16 : vector<128x128xf32>
    %cst_12 = arith.constant dense<0.000000e+00> : vector<128x128xf32>
    %18 = tpu.matmul %17, %0, %cst_12 {dimension_numbers = #tpu.dot_dimension_numbers<[1], [0], [0], [1], [0, 0, 1, 1], [], []>} : vector<128x128xf32>, vector<128x128xf32>, vector<128x128xf32> -> vector<128x128xf32>
    %19 = vector.broadcast %1 : vector<1x128xf32> to vector<128x128xf32>
    %20 = arith.addf %18, %19 : vector<128x128xf32>
    %c128_13 = arith.constant 128 : index
    %c0_14 = arith.constant 0 : index
    %21 = vector.load %arg4[%c128_13, %c0_14] : memref<256x128xf32, #tpu.memory_space<vmem>>, vector<128x128xf32>
    tpu.vector_store %arg4[%c128_13, %c0_14], %20 {strides = array<i32>} : memref<256x128xf32, #tpu.memory_space<vmem>>, vector<128x128xf32>,
    return
  }
  func.func @transform_0(%arg0: i32) -> (i32, i32) {
    %c0_i32 = arith.constant 0 : i32
    %c0_i32_0 = arith.constant 0 : i32
    return %arg0, %c0_i32 : i32, i32
  }
  func.func @transform_1(%arg0: i32) -> (i32, i32) {
    %c0_i32 = arith.constant 0 : i32
    %c0_i32_0 = arith.constant 0 : i32
    %c0_i32_1 = arith.constant 0 : i32
    return %c0_i32, %c0_i32_0 : i32, i32
  }
  func.func @transform_2(%arg0: i32) -> (i32, i32) {
    %c0_i32 = arith.constant 0 : i32
    %c0_i32_0 = arith.constant 0 : i32
    %c0_i32_1 = arith.constant 0 : i32
    return %c0_i32, %c0_i32_0 : i32, i32
  }
  func.func @transform_3(%arg0: i32) -> (i32, i32) {
    %c0_i32 = arith.constant 0 : i32
    %c0_i32_0 = arith.constant 0 : i32
    return %arg0, %c0_i32 : i32, i32
  }
}

</mosaic_0001>

<llo_original>
// kernel: one_layer_net.1
$region0: #{one_layer_net.1}
  #allocation0 [shape = 'u32[]', space=smem, size = 0x4, offset = 0x4, fixed_abs, tag = 'smem constant byte address 0x4 - core index']
  #allocation1 [shape = 'u32[144,128]{1,0:T(1,128)}', space=vmem, size = 0x12000, scoped, tag = 'internal scratch']
  %s0 = inlined_call_operand.hbm [shape: f32[256,128], index: 0, kind: input, shape index: {}]
  %s1 = inlined_call_operand.hbm [shape: f32[128,128], index: 1, kind: input, shape index: {}]
  %s2 = inlined_call_operand.vmem [shape: f32[1,128], index: 2, kind: input, shape index: {}]
  %s3 = inlined_call_operand.hbm [shape: f32[256,128], index: 3, kind: output, shape index: {}]
  %s4 = sld [smem:[#allocation0]]
  $region30: #{one_layer_net.1} parent=0
    _
  %s6 = ssub.s32 1, %s4
  %s7 = scalar_select 0, %s6, %s4
  $region1: #{one_layer_net.1} parent=0
    #allocation2 [shape = 'u8[131072]{0}', space=vmem, size = 0x20000, scoped, tag = 'input window, operand 0, single buffered']
    #allocation3 [shape = 's32[1]{0}', space=sflag, size = 0x4, scoped, tag = 'scoped memory for one_layer_net.1']
    #allocation4 [shape = 's32[1]{0}', space=sflag, size = 0x4, scoped, tag = 'scoped memory for one_layer_net.1']
    #allocation5 [shape = 'u8[65536]{0}', space=vmem, size = 0x10000, scoped, tag = 'input window, operand 1, single buffered']
    #allocation6 [shape = 's32[1]{0}', space=sflag, size = 0x4, scoped, tag = 'scoped memory for one_layer_net.1']
    #allocation7 [shape = 'u8[131072]{0}', space=vmem, size = 0x20000, scoped, tag = 'output window, operand 0, single buffered']
    %8 = vsyncpa [#allocation3], 0
    %9 = vsyncpa [#allocation6], 0
    %10 = vsyncpa [#allocation4], 0
    // Predicated region
    $region2: #{one_layer_net.1} parent=1 // pred_check
      _
    $region3: #{one_layer_net.1} parent=1 // pred_check_branch
      %12 = sbr.rel (0) target = $region5
    $region4: #{one_layer_net.1} parent=1 // pred_region
      %s14 = ssub.s32 4096, 4096
      %15 = vsyncadd [#allocation3], %s14
      %s16 = sshll.u32 [#allocation2], 4
      %s17 = int_to_ptr.vmem [resolvable:$true] %s16
      %22 = dma.hbm_to_vmem [thread:$0]  %s0, 4096, %s17, [#allocation3], 128, 128, 8
    $region5: #{one_layer_net.1} parent=1 // pred_fallthru
      _
    // Predicated region
    $region6: #{one_layer_net.1} parent=1 // pred_check
      _
    $region7: #{one_layer_net.1} parent=1 // pred_check_branch
      %24 = sbr.rel (0) target = $region9
    $region8: #{one_layer_net.1} parent=1 // pred_region
      %s26 = ssub.s32 2048, 2048
      %27 = vsyncadd [#allocation6], %s26
      %s28 = sshll.u32 [#allocation5], 4
      %s29 = int_to_ptr.vmem [resolvable:$true] %s28
      %34 = dma.hbm_to_vmem [thread:$0]  %s1, 2048, %s29, [#allocation6], 128, 128, 8
    $region9: #{one_layer_net.1} parent=1 // pred_fallthru
      _
    // Predicated region
    $region10: #{one_layer_net.1} parent=1 // pred_check
      _
    $region11: #{one_layer_net.1} parent=1 // pred_check_branch
      %36 = sbr.rel (0) target = $region13
    $region12: #{one_layer_net.1} parent=1 // pred_region
      _
    $region13: #{one_layer_net.1} parent=1 // pred_fallthru
      _
    // Predicated region
    $region14: #{one_layer_net.1} parent=1 // pred_check
      _
    $region15: #{one_layer_net.1} parent=1 // pred_check_branch
      %38 = sbr.rel (0) target = $region17
    $region16: #{one_layer_net.1} parent=1 // pred_region
      %39 = dma.done [#allocation3], 4096
    $region17: #{one_layer_net.1} parent=1 // pred_fallthru
      _
    // Predicated region
    $region18: #{one_layer_net.1} parent=1 // pred_check
      _
    $region19: #{one_layer_net.1} parent=1 // pred_check_branch
      %41 = sbr.rel (0) target = $region21
    $region20: #{one_layer_net.1} parent=1 // pred_region
      %42 = dma.done [#allocation6], 2048
    $region21: #{one_layer_net.1} parent=1 // pred_fallthru
      _
    %v43 = vld [vmem:[#allocation5] sm:$0xff]
    %v44 = vld [vmem:[#allocation5 + $0x8] sm:$0xff]
    %v45 = vld [vmem:[#allocation5 + $0x10] sm:$0xff]
    %v46 = vld [vmem:[#allocation5 + $0x18] sm:$0xff]
    %v47 = vld [vmem:[#allocation5 + $0x20] sm:$0xff]
    %v48 = vld [vmem:[#allocation5 + $0x28] sm:$0xff]
    %v49 = vld [vmem:[#allocation5 + $0x30] sm:$0xff]
    %v50 = vld [vmem:[#allocation5 + $0x38] sm:$0xff]
    %v51 = vld [vmem:[#allocation5 + $0x40] sm:$0xff]
    %v52 = vld [vmem:[#allocation5 + $0x48] sm:$0xff]
    %v53 = vld [vmem:[#allocation5 + $0x50] sm:$0xff]
    %v54 = vld [vmem:[#allocation5 + $0x58] sm:$0xff]
    %v55 = vld [vmem:[#allocation5 + $0x60] sm:$0xff]
    %v56 = vld [vmem:[#allocation5 + $0x68] sm:$0xff]
    %v57 = vld [vmem:[#allocation5 + $0x70] sm:$0xff]
    %v58 = vld [vmem:[#allocation5 + $0x78] sm:$0xff]
    %v59 = vld [vmem:[%s2] sm:$0x1]
    %v60 = vld [vmem:[#allocation2] sm:$0xff]
    %v61 = vld [vmem:[#allocation2 + $0x8] sm:$0xff]
    %v62 = vld [vmem:[#allocation2 + $0x10] sm:$0xff]
    %v63 = vld [vmem:[#allocation2 + $0x18] sm:$0xff]
    %v64 = vld [vmem:[#allocation2 + $0x20] sm:$0xff]
    %v65 = vld [vmem:[#allocation2 + $0x28] sm:$0xff]
    %v66 = vld [vmem:[#allocation2 + $0x30] sm:$0xff]
    %v67 = vld [vmem:[#allocation2 + $0x38] sm:$0xff]
    %v68 = vld [vmem:[#allocation2 + $0x40] sm:$0xff]
    %v69 = vld [vmem:[#allocation2 + $0x48] sm:$0xff]
    %v70 = vld [vmem:[#allocation2 + $0x50] sm:$0xff]
    %v71 = vld [vmem:[#allocation2 + $0x58] sm:$0xff]
    %v72 = vld [vmem:[#allocation2 + $0x60] sm:$0xff]
    %v73 = vld [vmem:[#allocation2 + $0x68] sm:$0xff]
    %v74 = vld [vmem:[#allocation2 + $0x70] sm:$0xff]
    %v75 = vld [vmem:[#allocation2 + $0x78] sm:$0xff]
    %v77 = vlaneseq
    %v78 = vshrl.u32 %v77, 7
    %v79 = vsub.s32 0, %v78
    %v80 = vrot.slane %v59, %v79
    %82 = vmatprep.subr.mxu0 0.0
    %83 = vmatpush1.msra.mxu0 %v43
    %84 = vmatprep.subr.mxu0 0.0
    %85 = vmatpush1.msra.mxu0 %v44
    %86 = vmatprep.subr.mxu0 0.0
    %87 = vmatpush1.msra.mxu0 %v45
    %88 = vmatprep.subr.mxu0 0.0
    %89 = vmatpush1.msra.mxu0 %v46
    %90 = vmatprep.subr.mxu0 0.0
    %91 = vmatpush1.msra.mxu0 %v47
    %92 = vmatprep.subr.mxu0 0.0
    %93 = vmatpush1.msra.mxu0 %v48
    %94 = vmatprep.subr.mxu0 0.0
    %95 = vmatpush1.msra.mxu0 %v49
    %96 = vmatprep.subr.mxu0 0.0
    %97 = vmatpush1.msra.mxu0 %v50
    %98 = vmatprep.subr.mxu0 0.0
    %99 = vmatpush1.msra.mxu0 %v51
    %100 = vmatprep.subr.mxu0 0.0
    %101 = vmatpush1.msra.mxu0 %v52
    %102 = vmatprep.subr.mxu0 0.0
    %103 = vmatpush1.msra.mxu0 %v53
    %104 = vmatprep.subr.mxu0 0.0
    %105 = vmatpush1.msra.mxu0 %v54
    %106 = vmatprep.subr.mxu0 0.0
    %107 = vmatpush1.msra.mxu0 %v55
    %108 = vmatprep.subr.mxu0 0.0
    %109 = vmatpush1.msra.mxu0 %v56
    %110 = vmatprep.subr.mxu0 0.0
    %111 = vmatpush1.msra.mxu0 %v57
    %112 = vmatprep.subr.mxu0 0.0
    %113 = vmatpush1.msra.mxu0 %v58
    %114 = vmatprep.subr.mxu0 0.0
    %115 = vmatpush1.msra.mxu0 0.0
    %116 = vmatprep.subr.mxu0 0.0
    %117 = vmatpush1.msra.mxu0 0.0
    %118 = vmatprep.subr.mxu0 0.0
    %119 = vmatpush1.msra.mxu0 0.0
    %120 = vmatprep.subr.mxu0 0.0
    %121 = vmatpush1.msra.mxu0 0.0
    %122 = vmatprep.subr.mxu0 0.0
    %123 = vmatpush1.msra.mxu0 0.0
    %124 = vmatprep.subr.mxu0 0.0
    %125 = vmatpush1.msra.mxu0 0.0
    %126 = vmatprep.subr.mxu0 0.0
    %127 = vmatpush1.msra.mxu0 0.0
    %128 = vmatprep.subr.mxu0 0.0
    %129 = vmatpush1.msra.mxu0 0.0
    %130 = vmatprep.subr.mxu0 0.0
    %131 = vmatpush1.msra.mxu0 0.0
    %132 = vmatprep.subr.mxu0 0.0
    %133 = vmatpush1.msra.mxu0 0.0
    %134 = vmatprep.subr.mxu0 0.0
    %135 = vmatpush1.msra.mxu0 0.0
    %136 = vmatprep.subr.mxu0 0.0
    %137 = vmatpush1.msra.mxu0 0.0
    %138 = vmatprep.subr.mxu0 0.0
    %139 = vmatpush1.msra.mxu0 0.0
    %140 = vmatprep.subr.mxu0 0.0
    %141 = vmatpush1.msra.mxu0 0.0
    %142 = vmatprep.subr.mxu0 0.0
    %143 = vmatpush1.msra.mxu0 0.0
    %144 = vmatprep.subr.mxu0 0.0
    %145 = vmatpush1.msra.mxu0 0.0
    %146 = vmatprep.mubr.f32.mxu0 0.0
    %147 = vmatmul.mubr.f32.gmra.mrb[0].mxu0 %v60
    %v148 = vpop.f32.mrb[0].mxu0
    %v149 = vadd.f32 %v80, %v148
    %v150 = vpop.f32.mrb[0].mxu0
    %151 = vmatprep.mubr.f32.mxu0 0.0
    %152 = vmatmul.mubr.f32.gmra.mrb[0].mxu0 %v61
    %v153 = vpop.f32.mrb[0].mxu0
    %v154 = vadd.f32 %v80, %v153
    %v155 = vpop.f32.mrb[0].mxu0
    %156 = vmatprep.mubr.f32.mxu0 0.0
    %157 = vmatmul.mubr.f32.gmra.mrb[0].mxu0 %v62
    %v158 = vpop.f32.mrb[0].mxu0
    %v159 = vadd.f32 %v80, %v158
    %v160 = vpop.f32.mrb[0].mxu0
    %161 = vmatprep.mubr.f32.mxu0 0.0
    %162 = vmatmul.mubr.f32.gmra.mrb[0].mxu0 %v63
    %v163 = vpop.f32.mrb[0].mxu0
    %v164 = vadd.f32 %v80, %v163
    %v165 = vpop.f32.mrb[0].mxu0
    %166 = vmatprep.mubr.f32.mxu0 0.0
    %167 = vmatmul.mubr.f32.gmra.mrb[0].mxu0 %v64
    %v168 = vpop.f32.mrb[0].mxu0
    %v169 = vadd.f32 %v80, %v168
    %v170 = vpop.f32.mrb[0].mxu0
    %171 = vmatprep.mubr.f32.mxu0 0.0
    %172 = vmatmul.mubr.f32.gmra.mrb[0].mxu0 %v65
    %v173 = vpop.f32.mrb[0].mxu0
    %v174 = vadd.f32 %v80, %v173
    %v175 = vpop.f32.mrb[0].mxu0
    %176 = vmatprep.mubr.f32.mxu0 0.0
    %177 = vmatmul.mubr.f32.gmra.mrb[0].mxu0 %v66
    %v178 = vpop.f32.mrb[0].mxu0
    %v179 = vadd.f32 %v80, %v178
    %v180 = vpop.f32.mrb[0].mxu0
    %181 = vmatprep.mubr.f32.mxu0 0.0
    %182 = vmatmul.mubr.f32.gmra.mrb[0].mxu0 %v67
    %v183 = vpop.f32.mrb[0].mxu0
    %v184 = vadd.f32 %v80, %v183
    %v185 = vpop.f32.mrb[0].mxu0
    %186 = vmatprep.mubr.f32.mxu0 0.0
    %187 = vmatmul.mubr.f32.gmra.mrb[0].mxu0 %v68
    %v188 = vpop.f32.mrb[0].mxu0
    %v189 = vadd.f32 %v80, %v188
    %v190 = vpop.f32.mrb[0].mxu0
    %191 = vmatprep.mubr.f32.mxu0 0.0
    %192 = vmatmul.mubr.f32.gmra.mrb[0].mxu0 %v69
    %v193 = vpop.f32.mrb[0].mxu0
    %v194 = vadd.f32 %v80, %v193
    %v195 = vpop.f32.mrb[0].mxu0
    %196 = vmatprep.mubr.f32.mxu0 0.0
    %197 = vmatmul.mubr.f32.gmra.mrb[0].mxu0 %v70
    %v198 = vpop.f32.mrb[0].mxu0
    %v199 = vadd.f32 %v80, %v198
    %v200 = vpop.f32.mrb[0].mxu0
    %201 = vmatprep.mubr.f32.mxu0 0.0
    %202 = vmatmul.mubr.f32.gmra.mrb[0].mxu0 %v71
    %v203 = vpop.f32.mrb[0].mxu0
    %v204 = vadd.f32 %v80, %v203
    %v205 = vpop.f32.mrb[0].mxu0
    %206 = vmatprep.mubr.f32.mxu0 0.0
    %207 = vmatmul.mubr.f32.gmra.mrb[0].mxu0 %v72
    %v208 = vpop.f32.mrb[0].mxu0
    %v209 = vadd.f32 %v80, %v208
    %v210 = vpop.f32.mrb[0].mxu0
    %211 = vmatprep.mubr.f32.mxu0 0.0
    %212 = vmatmul.mubr.f32.gmra.mrb[0].mxu0 %v73
    %v213 = vpop.f32.mrb[0].mxu0
    %v214 = vadd.f32 %v80, %v213
    %v215 = vpop.f32.mrb[0].mxu0
    %216 = vmatprep.mubr.f32.mxu0 0.0
    %217 = vmatmul.mubr.f32.gmra.mrb[0].mxu0 %v74
    %v218 = vpop.f32.mrb[0].mxu0
    %v219 = vadd.f32 %v80, %v218
    %v220 = vpop.f32.mrb[0].mxu0
    %221 = vmatprep.mubr.f32.mxu0 0.0
    %222 = vmatmul.mubr.f32.gmra.mrb[0].mxu0 %v75
    %v223 = vpop.f32.mrb[0].mxu0
    %v224 = vadd.f32 %v80, %v223
    %v225 = vpop.f32.mrb[0].mxu0
    %226 = vdwg.mxu0
    %v227 = vmax.f32 %v149, 0.0
    %v228 = vmax.f32 %v154, 0.0
    %v229 = vmax.f32 %v159, 0.0
    %v230 = vmax.f32 %v164, 0.0
    %v231 = vmax.f32 %v169, 0.0
    %v232 = vmax.f32 %v174, 0.0
    %v233 = vmax.f32 %v179, 0.0
    %v234 = vmax.f32 %v184, 0.0
    %v235 = vmax.f32 %v189, 0.0
    %v236 = vmax.f32 %v194, 0.0
    %v237 = vmax.f32 %v199, 0.0
    %v238 = vmax.f32 %v204, 0.0
    %v239 = vmax.f32 %v209, 0.0
    %v240 = vmax.f32 %v214, 0.0
    %v241 = vmax.f32 %v219, 0.0
    %v242 = vmax.f32 %v224, 0.0
    %243 = vmatprep.subr.mxu0 0.0
    %244 = vmatpush1.msra.mxu0 %v43
    %245 = vmatprep.subr.mxu0 0.0
    %246 = vmatpush1.msra.mxu0 %v44
    %247 = vmatprep.subr.mxu0 0.0
    %248 = vmatpush1.msra.mxu0 %v45
    %249 = vmatprep.subr.mxu0 0.0
    %250 = vmatpush1.msra.mxu0 %v46
    %251 = vmatprep.subr.mxu0 0.0
    %252 = vmatpush1.msra.mxu0 %v47
    %253 = vmatprep.subr.mxu0 0.0
    %254 = vmatpush1.msra.mxu0 %v48
    %255 = vmatprep.subr.mxu0 0.0
    %256 = vmatpush1.msra.mxu0 %v49
    %257 = vmatprep.subr.mxu0 0.0
    %258 = vmatpush1.msra.mxu0 %v50
    %259 = vmatprep.subr.mxu0 0.0
    %260 = vmatpush1.msra.mxu0 %v51
    %261 = vmatprep.subr.mxu0 0.0
    %262 = vmatpush1.msra.mxu0 %v52
    %263 = vmatprep.subr.mxu0 0.0
    %264 = vmatpush1.msra.mxu0 %v53
    %265 = vmatprep.subr.mxu0 0.0
    %266 = vmatpush1.msra.mxu0 %v54
    %267 = vmatprep.subr.mxu0 0.0
    %268 = vmatpush1.msra.mxu0 %v55
    %269 = vmatprep.subr.mxu0 0.0
    %270 = vmatpush1.msra.mxu0 %v56
    %271 = vmatprep.subr.mxu0 0.0
    %272 = vmatpush1.msra.mxu0 %v57
    %273 = vmatprep.subr.mxu0 0.0
    %274 = vmatpush1.msra.mxu0 %v58
    %275 = vmatprep.subr.mxu0 0.0
    %276 = vmatpush1.msra.mxu0 0.0
    %277 = vmatprep.subr.mxu0 0.0
    %278 = vmatpush1.msra.mxu0 0.0
    %279 = vmatprep.subr.mxu0 0.0
    %280 = vmatpush1.msra.mxu0 0.0
    %281 = vmatprep.subr.mxu0 0.0
    %282 = vmatpush1.msra.mxu0 0.0
    %283 = vmatprep.subr.mxu0 0.0
    %284 = vmatpush1.msra.mxu0 0.0
    %285 = vmatprep.subr.mxu0 0.0
    %286 = vmatpush1.msra.mxu0 0.0
    %287 = vmatprep.subr.mxu0 0.0
    %288 = vmatpush1.msra.mxu0 0.0
    %289 = vmatprep.subr.mxu0 0.0
    %290 = vmatpush1.msra.mxu0 0.0
    %291 = vmatprep.subr.mxu0 0.0
    %292 = vmatpush1.msra.mxu0 0.0
    %293 = vmatprep.subr.mxu0 0.0
    %294 = vmatpush1.msra.mxu0 0.0
    %295 = vmatprep.subr.mxu0 0.0
    %296 = vmatpush1.msra.mxu0 0.0
    %297 = vmatprep.subr.mxu0 0.0
    %298 = vmatpush1.msra.mxu0 0.0
    %299 = vmatprep.subr.mxu0 0.0
    %300 = vmatpush1.msra.mxu0 0.0
    %301 = vmatprep.subr.mxu0 0.0
    %302 = vmatpush1.msra.mxu0 0.0
    %303 = vmatprep.subr.mxu0 0.0
    %304 = vmatpush1.msra.mxu0 0.0
    %305 = vmatprep.subr.mxu0 0.0
    %306 = vmatpush1.msra.mxu0 0.0
    %307 = vmatprep.mubr.f32.mxu0 0.0
    %308 = vmatmul.mubr.f32.gmra.mrb[0].mxu0 %v227
    %v309 = vpop.f32.mrb[0].mxu0
    %v310 = vadd.f32 %v80, %v309
    %v311 = vpop.f32.mrb[0].mxu0
    %312 = vmatprep.mubr.f32.mxu0 0.0
    %313 = vmatmul.mubr.f32.gmra.mrb[0].mxu0 %v228
    %v314 = vpop.f32.mrb[0].mxu0
    %v315 = vadd.f32 %v80, %v314
    %v316 = vpop.f32.mrb[0].mxu0
    %317 = vmatprep.mubr.f32.mxu0 0.0
    %318 = vmatmul.mubr.f32.gmra.mrb[0].mxu0 %v229
    %v319 = vpop.f32.mrb[0].mxu0
    %v320 = vadd.f32 %v80, %v319
    %v321 = vpop.f32.mrb[0].mxu0
    %322 = vmatprep.mubr.f32.mxu0 0.0
    %323 = vmatmul.mubr.f32.gmra.mrb[0].mxu0 %v230
    %v324 = vpop.f32.mrb[0].mxu0
    %v325 = vadd.f32 %v80, %v324
    %v326 = vpop.f32.mrb[0].mxu0
    %327 = vmatprep.mubr.f32.mxu0 0.0
    %328 = vmatmul.mubr.f32.gmra.mrb[0].mxu0 %v231
    %v329 = vpop.f32.mrb[0].mxu0
    %v330 = vadd.f32 %v80, %v329
    %v331 = vpop.f32.mrb[0].mxu0
    %332 = vmatprep.mubr.f32.mxu0 0.0
    %333 = vmatmul.mubr.f32.gmra.mrb[0].mxu0 %v232
    %v334 = vpop.f32.mrb[0].mxu0
    %v335 = vadd.f32 %v80, %v334
    %v336 = vpop.f32.mrb[0].mxu0
    %337 = vmatprep.mubr.f32.mxu0 0.0
    %338 = vmatmul.mubr.f32.gmra.mrb[0].mxu0 %v233
    %v339 = vpop.f32.mrb[0].mxu0
    %v340 = vadd.f32 %v80, %v339
    %v341 = vpop.f32.mrb[0].mxu0
    %342 = vmatprep.mubr.f32.mxu0 0.0
    %343 = vmatmul.mubr.f32.gmra.mrb[0].mxu0 %v234
    %v344 = vpop.f32.mrb[0].mxu0
    %v345 = vadd.f32 %v80, %v344
    %v346 = vpop.f32.mrb[0].mxu0
    %347 = vmatprep.mubr.f32.mxu0 0.0
    %348 = vmatmul.mubr.f32.gmra.mrb[0].mxu0 %v235
    %v349 = vpop.f32.mrb[0].mxu0
    %v350 = vadd.f32 %v80, %v349
    %v351 = vpop.f32.mrb[0].mxu0
    %352 = vmatprep.mubr.f32.mxu0 0.0
    %353 = vmatmul.mubr.f32.gmra.mrb[0].mxu0 %v236
    %v354 = vpop.f32.mrb[0].mxu0
    %v355 = vadd.f32 %v80, %v354
    %v356 = vpop.f32.mrb[0].mxu0
    %357 = vmatprep.mubr.f32.mxu0 0.0
    %358 = vmatmul.mubr.f32.gmra.mrb[0].mxu0 %v237
    %v359 = vpop.f32.mrb[0].mxu0
    %v360 = vadd.f32 %v80, %v359
    %v361 = vpop.f32.mrb[0].mxu0
    %362 = vmatprep.mubr.f32.mxu0 0.0
    %363 = vmatmul.mubr.f32.gmra.mrb[0].mxu0 %v238
    %v364 = vpop.f32.mrb[0].mxu0
    %v365 = vadd.f32 %v80, %v364
    %v366 = vpop.f32.mrb[0].mxu0
    %367 = vmatprep.mubr.f32.mxu0 0.0
    %368 = vmatmul.mubr.f32.gmra.mrb[0].mxu0 %v239
    %v369 = vpop.f32.mrb[0].mxu0
    %v370 = vadd.f32 %v80, %v369
    %v371 = vpop.f32.mrb[0].mxu0
    %372 = vmatprep.mubr.f32.mxu0 0.0
    %373 = vmatmul.mubr.f32.gmra.mrb[0].mxu0 %v240
    %v374 = vpop.f32.mrb[0].mxu0
    %v375 = vadd.f32 %v80, %v374
    %v376 = vpop.f32.mrb[0].mxu0
    %377 = vmatprep.mubr.f32.mxu0 0.0
    %378 = vmatmul.mubr.f32.gmra.mrb[0].mxu0 %v241
    %v379 = vpop.f32.mrb[0].mxu0
    %v380 = vadd.f32 %v80, %v379
    %v381 = vpop.f32.mrb[0].mxu0
    %382 = vmatprep.mubr.f32.mxu0 0.0
    %383 = vmatmul.mubr.f32.gmra.mrb[0].mxu0 %v242
    %v384 = vpop.f32.mrb[0].mxu0
    %v385 = vadd.f32 %v80, %v384
    %v386 = vpop.f32.mrb[0].mxu0
    %387 = vdwg.mxu0
    %388 = vst [vmem:[#allocation7] sm:$0xff] %v310
    %389 = vst [vmem:[#allocation7 + $0x8] sm:$0xff] %v315
    %390 = vst [vmem:[#allocation7 + $0x10] sm:$0xff] %v320
    %391 = vst [vmem:[#allocation7 + $0x18] sm:$0xff] %v325
    %392 = vst [vmem:[#allocation7 + $0x20] sm:$0xff] %v330
    %393 = vst [vmem:[#allocation7 + $0x28] sm:$0xff] %v335
    %394 = vst [vmem:[#allocation7 + $0x30] sm:$0xff] %v340
    %395 = vst [vmem:[#allocation7 + $0x38] sm:$0xff] %v345
    %396 = vst [vmem:[#allocation7 + $0x40] sm:$0xff] %v350
    %397 = vst [vmem:[#allocation7 + $0x48] sm:$0xff] %v355
    %398 = vst [vmem:[#allocation7 + $0x50] sm:$0xff] %v360
    %399 = vst [vmem:[#allocation7 + $0x58] sm:$0xff] %v365
    %400 = vst [vmem:[#allocation7 + $0x60] sm:$0xff] %v370
    %401 = vst [vmem:[#allocation7 + $0x68] sm:$0xff] %v375
    %402 = vst [vmem:[#allocation7 + $0x70] sm:$0xff] %v380
    %403 = vst [vmem:[#allocation7 + $0x78] sm:$0xff] %v385
    %v404 = vld [vmem:[#allocation2 + $0x80] sm:$0xff]
    %v405 = vld [vmem:[#allocation2 + $0x88] sm:$0xff]
    %v406 = vld [vmem:[#allocation2 + $0x90] sm:$0xff]
    %v407 = vld [vmem:[#allocation2 + $0x98] sm:$0xff]
    %v408 = vld [vmem:[#allocation2 + $0xa0] sm:$0xff]
    %v409 = vld [vmem:[#allocation2 + $0xa8] sm:$0xff]
    %v410 = vld [vmem:[#allocation2 + $0xb0] sm:$0xff]
    %v411 = vld [vmem:[#allocation2 + $0xb8] sm:$0xff]
    %v412 = vld [vmem:[#allocation2 + $0xc0] sm:$0xff]
    %v413 = vld [vmem:[#allocation2 + $0xc8] sm:$0xff]
    %v414 = vld [vmem:[#allocation2 + $0xd0] sm:$0xff]
    %v415 = vld [vmem:[#allocation2 + $0xd8] sm:$0xff]
    %v416 = vld [vmem:[#allocation2 + $0xe0] sm:$0xff]
    %v417 = vld [vmem:[#allocation2 + $0xe8] sm:$0xff]
    %v418 = vld [vmem:[#allocation2 + $0xf0] sm:$0xff]
    %v419 = vld [vmem:[#allocation2 + $0xf8] sm:$0xff]
    %420 = vmatprep.subr.mxu0 0.0
    %421 = vmatpush1.msra.mxu0 %v43
    %422 = vmatprep.subr.mxu0 0.0
    %423 = vmatpush1.msra.mxu0 %v44
    %424 = vmatprep.subr.mxu0 0.0
    %425 = vmatpush1.msra.mxu0 %v45
    %426 = vmatprep.subr.mxu0 0.0
    %427 = vmatpush1.msra.mxu0 %v46
    %428 = vmatprep.subr.mxu0 0.0
    %429 = vmatpush1.msra.mxu0 %v47
    %430 = vmatprep.subr.mxu0 0.0
    %431 = vmatpush1.msra.mxu0 %v48
    %432 = vmatprep.subr.mxu0 0.0
    %433 = vmatpush1.msra.mxu0 %v49
    %434 = vmatprep.subr.mxu0 0.0
    %435 = vmatpush1.msra.mxu0 %v50
    %436 = vmatprep.subr.mxu0 0.0
    %437 = vmatpush1.msra.mxu0 %v51
    %438 = vmatprep.subr.mxu0 0.0
    %439 = vmatpush1.msra.mxu0 %v52
    %440 = vmatprep.subr.mxu0 0.0
    %441 = vmatpush1.msra.mxu0 %v53
    %442 = vmatprep.subr.mxu0 0.0
    %443 = vmatpush1.msra.mxu0 %v54
    %444 = vmatprep.subr.mxu0 0.0
    %445 = vmatpush1.msra.mxu0 %v55
    %446 = vmatprep.subr.mxu0 0.0
    %447 = vmatpush1.msra.mxu0 %v56
    %448 = vmatprep.subr.mxu0 0.0
    %449 = vmatpush1.msra.mxu0 %v57
    %450 = vmatprep.subr.mxu0 0.0
    %451 = vmatpush1.msra.mxu0 %v58
    %452 = vmatprep.subr.mxu0 0.0
    %453 = vmatpush1.msra.mxu0 0.0
    %454 = vmatprep.subr.mxu0 0.0
    %455 = vmatpush1.msra.mxu0 0.0
    %456 = vmatprep.subr.mxu0 0.0
    %457 = vmatpush1.msra.mxu0 0.0
    %458 = vmatprep.subr.mxu0 0.0
    %459 = vmatpush1.msra.mxu0 0.0
    %460 = vmatprep.subr.mxu0 0.0
    %461 = vmatpush1.msra.mxu0 0.0
    %462 = vmatprep.subr.mxu0 0.0
    %463 = vmatpush1.msra.mxu0 0.0
    %464 = vmatprep.subr.mxu0 0.0
    %465 = vmatpush1.msra.mxu0 0.0
    %466 = vmatprep.subr.mxu0 0.0
    %467 = vmatpush1.msra.mxu0 0.0
    %468 = vmatprep.subr.mxu0 0.0
    %469 = vmatpush1.msra.mxu0 0.0
    %470 = vmatprep.subr.mxu0 0.0
    %471 = vmatpush1.msra.mxu0 0.0
    %472 = vmatprep.subr.mxu0 0.0
    %473 = vmatpush1.msra.mxu0 0.0
    %474 = vmatprep.subr.mxu0 0.0
    %475 = vmatpush1.msra.mxu0 0.0
    %476 = vmatprep.subr.mxu0 0.0
    %477 = vmatpush1.msra.mxu0 0.0
    %478 = vmatprep.subr.mxu0 0.0
    %479 = vmatpush1.msra.mxu0 0.0
    %480 = vmatprep.subr.mxu0 0.0
    %481 = vmatpush1.msra.mxu0 0.0
    %482 = vmatprep.subr.mxu0 0.0
    %483 = vmatpush1.msra.mxu0 0.0
    %484 = vmatprep.mubr.f32.mxu0 0.0
    %485 = vmatmul.mubr.f32.gmra.mrb[0].mxu0 %v404
    %v486 = vpop.f32.mrb[0].mxu0
    %v487 = vadd.f32 %v80, %v486
    %v488 = vpop.f32.mrb[0].mxu0
    %489 = vmatprep.mubr.f32.mxu0 0.0
    %490 = vmatmul.mubr.f32.gmra.mrb[0].mxu0 %v405
    %v491 = vpop.f32.mrb[0].mxu0
    %v492 = vadd.f32 %v80, %v491
    %v493 = vpop.f32.mrb[0].mxu0
    %494 = vmatprep.mubr.f32.mxu0 0.0
    %495 = vmatmul.mubr.f32.gmra.mrb[0].mxu0 %v406
    %v496 = vpop.f32.mrb[0].mxu0
    %v497 = vadd.f32 %v80, %v496
    %v498 = vpop.f32.mrb[0].mxu0
    %499 = vmatprep.mubr.f32.mxu0 0.0
    %500 = vmatmul.mubr.f32.gmra.mrb[0].mxu0 %v407
    %v501 = vpop.f32.mrb[0].mxu0
    %v502 = vadd.f32 %v80, %v501
    %v503 = vpop.f32.mrb[0].mxu0
    %504 = vmatprep.mubr.f32.mxu0 0.0
    %505 = vmatmul.mubr.f32.gmra.mrb[0].mxu0 %v408
    %v506 = vpop.f32.mrb[0].mxu0
    %v507 = vadd.f32 %v80, %v506
    %v508 = vpop.f32.mrb[0].mxu0
    %509 = vmatprep.mubr.f32.mxu0 0.0
    %510 = vmatmul.mubr.f32.gmra.mrb[0].mxu0 %v409
    %v511 = vpop.f32.mrb[0].mxu0
    %v512 = vadd.f32 %v80, %v511
    %v513 = vpop.f32.mrb[0].mxu0
    %514 = vmatprep.mubr.f32.mxu0 0.0
    %515 = vmatmul.mubr.f32.gmra.mrb[0].mxu0 %v410
    %v516 = vpop.f32.mrb[0].mxu0
    %v517 = vadd.f32 %v80, %v516
    %v518 = vpop.f32.mrb[0].mxu0
    %519 = vmatprep.mubr.f32.mxu0 0.0
    %520 = vmatmul.mubr.f32.gmra.mrb[0].mxu0 %v411
    %v521 = vpop.f32.mrb[0].mxu0
    %v522 = vadd.f32 %v80, %v521
    %v523 = vpop.f32.mrb[0].mxu0
    %524 = vmatprep.mubr.f32.mxu0 0.0
    %525 = vmatmul.mubr.f32.gmra.mrb[0].mxu0 %v412
    %v526 = vpop.f32.mrb[0].mxu0
    %v527 = vadd.f32 %v80, %v526
    %v528 = vpop.f32.mrb[0].mxu0
    %529 = vmatprep.mubr.f32.mxu0 0.0
    %530 = vmatmul.mubr.f32.gmra.mrb[0].mxu0 %v413
    %v531 = vpop.f32.mrb[0].mxu0
    %v532 = vadd.f32 %v80, %v531
    %v533 = vpop.f32.mrb[0].mxu0
    %534 = vmatprep.mubr.f32.mxu0 0.0
    %535 = vmatmul.mubr.f32.gmra.mrb[0].mxu0 %v414
    %v536 = vpop.f32.mrb[0].mxu0
    %v537 = vadd.f32 %v80, %v536
    %v538 = vpop.f32.mrb[0].mxu0
    %539 = vmatprep.mubr.f32.mxu0 0.0
    %540 = vmatmul.mubr.f32.gmra.mrb[0].mxu0 %v415
    %v541 = vpop.f32.mrb[0].mxu0
    %v542 = vadd.f32 %v80, %v541
    %v543 = vpop.f32.mrb[0].mxu0
    %544 = vmatprep.mubr.f32.mxu0 0.0
    %545 = vmatmul.mubr.f32.gmra.mrb[0].mxu0 %v416
    %v546 = vpop.f32.mrb[0].mxu0
    %v547 = vadd.f32 %v80, %v546
    %v548 = vpop.f32.mrb[0].mxu0
    %549 = vmatprep.mubr.f32.mxu0 0.0
    %550 = vmatmul.mubr.f32.gmra.mrb[0].mxu0 %v417
    %v551 = vpop.f32.mrb[0].mxu0
    %v552 = vadd.f32 %v80, %v551
    %v553 = vpop.f32.mrb[0].mxu0
    %554 = vmatprep.mubr.f32.mxu0 0.0
    %555 = vmatmul.mubr.f32.gmra.mrb[0].mxu0 %v418
    %v556 = vpop.f32.mrb[0].mxu0
    %v557 = vadd.f32 %v80, %v556
    %v558 = vpop.f32.mrb[0].mxu0
    %559 = vmatprep.mubr.f32.mxu0 0.0
    %560 = vmatmul.mubr.f32.gmra.mrb[0].mxu0 %v419
    %v561 = vpop.f32.mrb[0].mxu0
    %v562 = vadd.f32 %v80, %v561
    %v563 = vpop.f32.mrb[0].mxu0
    %564 = vdwg.mxu0
    %v565 = vmax.f32 %v487, 0.0
    %v566 = vmax.f32 %v492, 0.0
    %v567 = vmax.f32 %v497, 0.0
    %v568 = vmax.f32 %v502, 0.0
    %v569 = vmax.f32 %v507, 0.0
    %v570 = vmax.f32 %v512, 0.0
    %v571 = vmax.f32 %v517, 0.0
    %v572 = vmax.f32 %v522, 0.0
    %v573 = vmax.f32 %v527, 0.0
    %v574 = vmax.f32 %v532, 0.0
    %v575 = vmax.f32 %v537, 0.0
    %v576 = vmax.f32 %v542, 0.0
    %v577 = vmax.f32 %v547, 0.0
    %v578 = vmax.f32 %v552, 0.0
    %v579 = vmax.f32 %v557, 0.0
    %v580 = vmax.f32 %v562, 0.0
    %581 = vmatprep.subr.mxu0 0.0
    %582 = vmatpush1.msra.mxu0 %v43
    %583 = vmatprep.subr.mxu0 0.0
    %584 = vmatpush1.msra.mxu0 %v44
    %585 = vmatprep.subr.mxu0 0.0
    %586 = vmatpush1.msra.mxu0 %v45
    %587 = vmatprep.subr.mxu0 0.0
    %588 = vmatpush1.msra.mxu0 %v46
    %589 = vmatprep.subr.mxu0 0.0
    %590 = vmatpush1.msra.mxu0 %v47
    %591 = vmatprep.subr.mxu0 0.0
    %592 = vmatpush1.msra.mxu0 %v48
    %593 = vmatprep.subr.mxu0 0.0
    %594 = vmatpush1.msra.mxu0 %v49
    %595 = vmatprep.subr.mxu0 0.0
    %596 = vmatpush1.msra.mxu0 %v50
    %597 = vmatprep.subr.mxu0 0.0
    %598 = vmatpush1.msra.mxu0 %v51
    %599 = vmatprep.subr.mxu0 0.0
    %600 = vmatpush1.msra.mxu0 %v52
    %601 = vmatprep.subr.mxu0 0.0
    %602 = vmatpush1.msra.mxu0 %v53
    %603 = vmatprep.subr.mxu0 0.0
    %604 = vmatpush1.msra.mxu0 %v54
    %605 = vmatprep.subr.mxu0 0.0
    %606 = vmatpush1.msra.mxu0 %v55
    %607 = vmatprep.subr.mxu0 0.0
    %608 = vmatpush1.msra.mxu0 %v56
    %609 = vmatprep.subr.mxu0 0.0
    %610 = vmatpush1.msra.mxu0 %v57
    %611 = vmatprep.subr.mxu0 0.0
    %612 = vmatpush1.msra.mxu0 %v58
    %613 = vmatprep.subr.mxu0 0.0
    %614 = vmatpush1.msra.mxu0 0.0
    %615 = vmatprep.subr.mxu0 0.0
    %616 = vmatpush1.msra.mxu0 0.0
    %617 = vmatprep.subr.mxu0 0.0
    %618 = vmatpush1.msra.mxu0 0.0
    %619 = vmatprep.subr.mxu0 0.0
    %620 = vmatpush1.msra.mxu0 0.0
    %621 = vmatprep.subr.mxu0 0.0
    %622 = vmatpush1.msra.mxu0 0.0
    %623 = vmatprep.subr.mxu0 0.0
    %624 = vmatpush1.msra.mxu0 0.0
    %625 = vmatprep.subr.mxu0 0.0
    %626 = vmatpush1.msra.mxu0 0.0
    %627 = vmatprep.subr.mxu0 0.0
    %628 = vmatpush1.msra.mxu0 0.0
    %629 = vmatprep.subr.mxu0 0.0
    %630 = vmatpush1.msra.mxu0 0.0
    %631 = vmatprep.subr.mxu0 0.0
    %632 = vmatpush1.msra.mxu0 0.0
    %633 = vmatprep.subr.mxu0 0.0
    %634 = vmatpush1.msra.mxu0 0.0
    %635 = vmatprep.subr.mxu0 0.0
    %636 = vmatpush1.msra.mxu0 0.0
    %637 = vmatprep.subr.mxu0 0.0
    %638 = vmatpush1.msra.mxu0 0.0
    %639 = vmatprep.subr.mxu0 0.0
    %640 = vmatpush1.msra.mxu0 0.0
    %641 = vmatprep.subr.mxu0 0.0
    %642 = vmatpush1.msra.mxu0 0.0
    %643 = vmatprep.subr.mxu0 0.0
    %644 = vmatpush1.msra.mxu0 0.0
    %645 = vmatprep.mubr.f32.mxu0 0.0
    %646 = vmatmul.mubr.f32.gmra.mrb[0].mxu0 %v565
    %v647 = vpop.f32.mrb[0].mxu0
    %v648 = vadd.f32 %v80, %v647
    %v649 = vpop.f32.mrb[0].mxu0
    %650 = vmatprep.mubr.f32.mxu0 0.0
    %651 = vmatmul.mubr.f32.gmra.mrb[0].mxu0 %v566
    %v652 = vpop.f32.mrb[0].mxu0
    %v653 = vadd.f32 %v80, %v652
    %v654 = vpop.f32.mrb[0].mxu0
    %655 = vmatprep.mubr.f32.mxu0 0.0
    %656 = vmatmul.mubr.f32.gmra.mrb[0].mxu0 %v567
    %v657 = vpop.f32.mrb[0].mxu0
    %v658 = vadd.f32 %v80, %v657
    %v659 = vpop.f32.mrb[0].mxu0
    %660 = vmatprep.mubr.f32.mxu0 0.0
    %661 = vmatmul.mubr.f32.gmra.mrb[0].mxu0 %v568
    %v662 = vpop.f32.mrb[0].mxu0
    %v663 = vadd.f32 %v80, %v662
    %v664 = vpop.f32.mrb[0].mxu0
    %665 = vmatprep.mubr.f32.mxu0 0.0
    %666 = vmatmul.mubr.f32.gmra.mrb[0].mxu0 %v569
    %v667 = vpop.f32.mrb[0].mxu0
    %v668 = vadd.f32 %v80, %v667
    %v669 = vpop.f32.mrb[0].mxu0
    %670 = vmatprep.mubr.f32.mxu0 0.0
    %671 = vmatmul.mubr.f32.gmra.mrb[0].mxu0 %v570
    %v672 = vpop.f32.mrb[0].mxu0
    %v673 = vadd.f32 %v80, %v672
    %v674 = vpop.f32.mrb[0].mxu0
    %675 = vmatprep.mubr.f32.mxu0 0.0
    %676 = vmatmul.mubr.f32.gmra.mrb[0].mxu0 %v571
    %v677 = vpop.f32.mrb[0].mxu0
    %v678 = vadd.f32 %v80, %v677
    %v679 = vpop.f32.mrb[0].mxu0
    %680 = vmatprep.mubr.f32.mxu0 0.0
    %681 = vmatmul.mubr.f32.gmra.mrb[0].mxu0 %v572
    %v682 = vpop.f32.mrb[0].mxu0
    %v683 = vadd.f32 %v80, %v682
    %v684 = vpop.f32.mrb[0].mxu0
    %685 = vmatprep.mubr.f32.mxu0 0.0
    %686 = vmatmul.mubr.f32.gmra.mrb[0].mxu0 %v573
    %v687 = vpop.f32.mrb[0].mxu0
    %v688 = vadd.f32 %v80, %v687
    %v689 = vpop.f32.mrb[0].mxu0
    %690 = vmatprep.mubr.f32.mxu0 0.0
    %691 = vmatmul.mubr.f32.gmra.mrb[0].mxu0 %v574
    %v692 = vpop.f32.mrb[0].mxu0
    %v693 = vadd.f32 %v80, %v692
    %v694 = vpop.f32.mrb[0].mxu0
    %695 = vmatprep.mubr.f32.mxu0 0.0
    %696 = vmatmul.mubr.f32.gmra.mrb[0].mxu0 %v575
    %v697 = vpop.f32.mrb[0].mxu0
    %v698 = vadd.f32 %v80, %v697
    %v699 = vpop.f32.mrb[0].mxu0
    %700 = vmatprep.mubr.f32.mxu0 0.0
    %701 = vmatmul.mubr.f32.gmra.mrb[0].mxu0 %v576
    %v702 = vpop.f32.mrb[0].mxu0
    %v703 = vadd.f32 %v80, %v702
    %v704 = vpop.f32.mrb[0].mxu0
    %705 = vmatprep.mubr.f32.mxu0 0.0
    %706 = vmatmul.mubr.f32.gmra.mrb[0].mxu0 %v577
    %v707 = vpop.f32.mrb[0].mxu0
    %v708 = vadd.f32 %v80, %v707
    %v709 = vpop.f32.mrb[0].mxu0
    %710 = vmatprep.mubr.f32.mxu0 0.0
    %711 = vmatmul.mubr.f32.gmra.mrb[0].mxu0 %v578
    %v712 = vpop.f32.mrb[0].mxu0
    %v713 = vadd.f32 %v80, %v712
    %v714 = vpop.f32.mrb[0].mxu0
    %715 = vmatprep.mubr.f32.mxu0 0.0
    %716 = vmatmul.mubr.f32.gmra.mrb[0].mxu0 %v579
    %v717 = vpop.f32.mrb[0].mxu0
    %v718 = vadd.f32 %v80, %v717
    %v719 = vpop.f32.mrb[0].mxu0
    %720 = vmatprep.mubr.f32.mxu0 0.0
    %721 = vmatmul.mubr.f32.gmra.mrb[0].mxu0 %v580
    %v722 = vpop.f32.mrb[0].mxu0
    %v723 = vadd.f32 %v80, %v722
    %v724 = vpop.f32.mrb[0].mxu0
    %725 = vdwg.mxu0
    %726 = vst [vmem:[#allocation7 + $0x80] sm:$0xff] %v648
    %727 = vst [vmem:[#allocation7 + $0x88] sm:$0xff] %v653
    %728 = vst [vmem:[#allocation7 + $0x90] sm:$0xff] %v658
    %729 = vst [vmem:[#allocation7 + $0x98] sm:$0xff] %v663
    %730 = vst [vmem:[#allocation7 + $0xa0] sm:$0xff] %v668
    %731 = vst [vmem:[#allocation7 + $0xa8] sm:$0xff] %v673
    %732 = vst [vmem:[#allocation7 + $0xb0] sm:$0xff] %v678
    %733 = vst [vmem:[#allocation7 + $0xb8] sm:$0xff] %v683
    %734 = vst [vmem:[#allocation7 + $0xc0] sm:$0xff] %v688
    %735 = vst [vmem:[#allocation7 + $0xc8] sm:$0xff] %v693
    %736 = vst [vmem:[#allocation7 + $0xd0] sm:$0xff] %v698
    %737 = vst [vmem:[#allocation7 + $0xd8] sm:$0xff] %v703
    %738 = vst [vmem:[#allocation7 + $0xe0] sm:$0xff] %v708
    %739 = vst [vmem:[#allocation7 + $0xe8] sm:$0xff] %v713
    %740 = vst [vmem:[#allocation7 + $0xf0] sm:$0xff] %v718
    %741 = vst [vmem:[#allocation7 + $0xf8] sm:$0xff] %v723
    // Predicated region
    $region22: #{one_layer_net.1} parent=1 // pred_check
      _
    $region23: #{one_layer_net.1} parent=1 // pred_check_branch
      %743 = sbr.rel (0) target = $region25
    $region24: #{one_layer_net.1} parent=1 // pred_region
      %s745 = ssub.s32 4096, 4096
      %746 = vsyncadd [#allocation4], %s745
      %s747 = sshll.u32 [#allocation7], 4
      %s748 = int_to_ptr.vmem [resolvable:$true] %s747
      %753 = dma.vmem_to_hbm [thread:$0]  %s748, 4096, %s3, [#allocation4], 128, 128, 8
    $region25: #{one_layer_net.1} parent=1 // pred_fallthru
      _
    // Predicated region
    $region26: #{one_layer_net.1} parent=1 // pred_check
      _
    $region27: #{one_layer_net.1} parent=1 // pred_check_branch
      %755 = sbr.rel (0) target = $region29
    $region28: #{one_layer_net.1} parent=1 // pred_region
      %756 = dma.done [#allocation4], 4096
    $region29: #{one_layer_net.1} parent=1 // pred_fallthru
      _
    %757 = vsyncpa [#allocation3], 1
    %758 = vsyncpa [#allocation6], 1
    %759 = vsyncpa [#allocation4], 1

</llo_original>
